<compile_context>
chip_gen: v7x
topology: tpu7x:2x2x1
jax: 0.10.0
libtpu: 0.0.40
codegen_flags: <defaults>
</compile_context>

<pallas_src>
import functools

import jax
import jax.numpy as jnp
from jax.experimental import pallas as pl
from jax.experimental.pallas import tpu as pltpu


def _ms_loss_kernel(pred_ref, true_ref, out_ref, *, level_weights, max_level,
                    width, pack):
    """Processes one (rows, pack*width) block; writes its unnormalized partial."""
    u = pred_ref[...].astype(jnp.float32) - true_ref[...].astype(jnp.float32)
    rows, lanes = u.shape
    lw = dict(level_weights)
    acc = jnp.float32(0.0)

    # scale 1 (level 0): plain L1 sum over the block (zero-padded rows add 0).
    if 0 in lw:
        acc = acc + lw[0] * jnp.sum(jnp.abs(u))

    if max_level > 0:
        # Index vectors built once and reused by every level's validity mask.
        lane_idx = jax.lax.broadcasted_iota(jnp.int32, (1, lanes), 1)
        row_idx = jax.lax.broadcasted_iota(jnp.int32, (rows, 1), 0)

    # Hierarchical pool-by-2.  `u` keeps its full shape; after level L, position
    # (r', j) holds the 2^L x 2^L window *sum* whose top-left corner is original
    # row r = r'*pack + j // width, column w = j % width.  Only positions with
    # r % 2^L == 0 and w % 2^L == 0 are valid; everything else is masked out.
    # All rolls use positive shifts (size - d) == fetch-from-(index + d).
    for level in range(1, max_level + 1):
        s = 1 << level
        d = 1 << (level - 1)
        # Pool along W: partner is d original columns to the right (same chunk).
        u = u + pltpu.roll(u, lanes - d, 1)
        # Pool along H: partner is d original rows below.
        if d < pack:
            # Same packed row, d chunks (= d*width lanes) to the right.
            u = u + pltpu.roll(u, lanes - d * width, 1)
        else:
            # d // pack packed rows below (sublane roll).
            u = u + pltpu.roll(u, rows - d // pack, 0)
        if level in lw:
            # Valid lanes: w % s == 0 and chunk % min(s, pack) == 0.  The moduli
            # are powers of two (and pack > 1 implies width is a power of two),
            # so both tests collapse into one bit-test.
            lane_bits = (s - 1) | ((min(s, pack) - 1) * width)
            ok = (lane_idx & lane_bits) == 0
            if s > pack:  # valid packed rows: r' % (s // pack) == 0
                ok = ok & ((row_idx & (s // pack - 1)) == 0)
            acc = acc + lw[level] * jnp.sum(jnp.where(ok, jnp.abs(u), 0.0))

    out_ref[...] = acc.reshape(1, 1, 1)


def _vmem_capacity_bytes():
    get_info = getattr(pltpu, "get_tpu_info", None)
    if get_info is not None:
        try:
            cap = getattr(get_info(), "vmem_capacity_bytes", None)
            if cap:
                return int(cap)
        except Exception:
            pass
    return 64 * 1024 * 1024  # assume the smallest (v7x) when unknown


def multi_scale_loss(y_pred, y_true, scales=(1, 2, 4, 8), weights=None, *,
                     vmem_working_set_bytes=None, vmem_limit_bytes=None):
    """Pallas TPU implementation of MultiScaleLoss.forward with L1 loss."""
    if weights is None:
        weights = tuple(1.0 / len(scales) for _ in scales)
    assert len(weights) == len(scales)
    assert y_pred.shape == y_true.shape and y_pred.ndim == 4
    B, C, H, W = y_pred.shape
    N = B * C

    # Map scales -> hierarchical pool-by-2 levels (power-of-two scales only).
    level_weights = {}
    for w_s, s in zip(weights, scales):
        s = int(s)
        assert s >= 1 and (s & (s - 1)) == 0, "scales must be powers of two"
        lvl = s.bit_length() - 1
        level_weights[lvl] = level_weights.get(lvl, 0.0) + float(w_s)
    max_level = max(level_weights)
    max_scale = 1 << max_level
    assert H % max_scale == 0 and W % max_scale == 0, (
        "spatial dims must be divisible by the largest scale")

    itemsize = max(jnp.dtype(y_pred.dtype).itemsize,
                   jnp.dtype(y_true.dtype).itemsize)

    # --- lane packing for narrow images (free row-major reshape).
    if W < 128 and (W & (W - 1)) == 0:
        pack = 128 // W
    else:
        pack = 1
    lanes = pack * W

    # --- generation-aware VMEM budget.
    cap = _vmem_capacity_bytes()
    big_vmem = cap >= (112 << 20)            # v5e / v6e (128 MiB physical)
    if vmem_working_set_bytes is None:
        vmem_working_set_bytes = (64 << 20) if big_vmem else (26 << 20)
    if vmem_limit_bytes is None:
        vmem_limit_bytes = min((100 << 20) if big_vmem else (56 << 20),
                               cap - (8 << 20))

    # --- row-block sizing.
    # Blocks must hold whole pooling windows (max_scale original rows ==
    # max_scale // pack packed rows) and whole sublane tiles.
    sublane_q = 8 * max(1, 4 // itemsize)          # 8 f32, 16 bf16, 32 int8
    q = max(sublane_q, max(1, max_scale // pack))  # powers of two -> max == lcm
    rows_total = N * H
    packed_total = -(-rows_total // pack)
    nq = -(-packed_total // q)

    # Working set per packed row: 2 inputs x 2 pipeline buffers + ~16 B of f32
    # temporaries per element (diff, rolled copy, masked |.|), lane-padded.
    lanes_padded = -(-lanes // 128) * 128
    bytes_per_row = lanes_padded * (4 * itemsize + 16)
    m_budget = max(1, int(vmem_working_set_bytes) // (bytes_per_row * q))
    m = max(1, min(m_budget, nq))
    if nq >= 2:  # keep >= 2 parallel programs so both v7x TensorCores get work
        m = max(1, min(m, (nq + 1) // 2))
    tb = m * q                      # packed rows per grid step
    grid = -(-nq // m)
    padded_rows = grid * tb * pack  # original rows after padding

    pred = y_pred.reshape(rows_total, W)
    true = y_true.reshape(rows_total, W)
    if padded_rows != rows_total:
        # Zero-padded rows have zero difference at every scale -> contribute 0.
        pad = ((0, padded_rows - rows_total), (0, 0))
        pred = jnp.pad(pred, pad)
        true = jnp.pad(true, pad)
    pred = pred.reshape(padded_rows // pack, lanes)  # free row-major reshape
    true = true.reshape(padded_rows // pack, lanes)

    kernel = functools.partial(
        _ms_loss_kernel,
        level_weights=tuple(sorted(level_weights.items())),
        max_level=max_level, width=W, pack=pack)

    # Advisory cost estimate: streaming two inputs + a few VPU ops per element.
    elems = padded_rows * W
    flops = elems * (3 + 4 * max_level)
    bytes_accessed = elems * (jnp.dtype(y_pred.dtype).itemsize +
                              jnp.dtype(y_true.dtype).itemsize) + grid * 4

    out = pl.pallas_call(
        kernel,
        out_shape=jax.ShapeDtypeStruct((grid, 1, 1), jnp.float32),
        grid_spec=pltpu.PrefetchScalarGridSpec(
            num_scalar_prefetch=0,
            grid=(grid,),
            in_specs=[
                pl.BlockSpec((tb, lanes), lambda g: (g, 0)),
                pl.BlockSpec((tb, lanes), lambda g: (g, 0)),
            ],
            out_specs=pl.BlockSpec((1, 1, 1), lambda g: (g, 0, 0)),
        ),
        compiler_params=pltpu.CompilerParams(
            dimension_semantics=("parallel",),
            vmem_limit_bytes=int(vmem_limit_bytes),
        ),
        cost_estimate=pl.CostEstimate(
            flops=int(flops), transcendentals=0,
            bytes_accessed=int(bytes_accessed)),
    )(pred, true)

    # For every scale s the mean normalizer is N*(H/s)*(W/s)*s^2 = N*H*W, so a
    # single division covers all scales.
    return jnp.sum(out) / jnp.float32(N * H * W)


def _reference_loss(y_pred, y_true, scales=(1, 2, 4, 8), weights=None):
    """Pure-JAX reference matching F.avg_pool2d + F.l1_loss (mean)."""
    if weights is None:
        weights = tuple(1.0 / len(scales) for _ in scales)
    B, C, H, W = y_pred.shape
    loss = jnp.float32(0.0)
    for w, s in zip(weights, scales):
        if s > 1:
            p = y_pred.reshape(B, C, H // s, s, W // s, s).mean(axis=(3, 5))
            t = y_true.reshape(B, C, H // s, s, W // s, s).mean(axis=(3, 5))
        else:
            p, t = y_pred, y_true
        loss = loss + w * jnp.mean(jnp.abs(p - t))
    return loss


if __name__ == "__main__":
    key = jax.random.PRNGKey(0)
    k1, k2 = jax.random.split(key)
    B, C, H, W = 2, 4, 16, 16
    y_pred = jax.random.normal(k1, (B, C, H, W), dtype=jnp.float32)
    y_true = jax.random.normal(k2, (B, C, H, W), dtype=jnp.float32)

    # f32 inputs, default scales/weights (lane-packed path, W=16 -> pack=8).
    loss = jax.block_until_ready(multi_scale_loss(y_pred, y_true))
    ref = jax.block_until_ready(_reference_loss(y_pred, y_true))
    assert jnp.allclose(loss, ref, atol=1e-5, rtol=1e-4), (loss, ref)

    # bf16 inputs stream in their native dtype (no wrapper f32 pre-cast).
    yp16 = y_pred.astype(jnp.bfloat16)
    yt16 = y_true.astype(jnp.bfloat16)
    loss16 = jax.block_until_ready(multi_scale_loss(yp16, yt16))
    ref16 = jax.block_until_ready(
        _reference_loss(yp16.astype(jnp.float32), yt16.astype(jnp.float32)))
    assert jnp.allclose(loss16, ref16, atol=1e-4, rtol=1e-3), (loss16, ref16)

    # Non-default scales / weights.
    loss_w = jax.block_until_ready(
        multi_scale_loss(y_pred, y_true, scales=(1, 2, 4),
                         weights=(0.5, 0.3, 0.2)))
    ref_w = jax.block_until_ready(
        _reference_loss(y_pred, y_true, scales=(1, 2, 4),
                        weights=(0.5, 0.3, 0.2)))
    assert jnp.allclose(loss_w, ref_w, atol=1e-5, rtol=1e-4), (loss_w, ref_w)

    # W >= 128 path: no lane packing, sublane-roll pooling, >= 2 grid steps.
    k3, k4 = jax.random.split(k1)
    yp_l = jax.random.normal(k3, (1, 2, 16, 128), dtype=jnp.float32)
    yt_l = jax.random.normal(k4, (1, 2, 16, 128), dtype=jnp.float32)
    loss_l = jax.block_until_ready(multi_scale_loss(yp_l, yt_l))
    ref_l = jax.block_until_ready(_reference_loss(yp_l, yt_l))
    assert jnp.allclose(loss_l, ref_l, atol=1e-5, rtol=1e-4), (loss_l, ref_l)

    # Zero-row-padding + small VMEM budget (multi-step grid) path.
    k5, k6 = jax.random.split(k2)
    yp_p = jax.random.normal(k5, (1, 5, 16, 16), dtype=jnp.float32)
    yt_p = jax.random.normal(k6, (1, 5, 16, 16), dtype=jnp.float32)
    loss_p = jax.block_until_ready(
        multi_scale_loss(yp_p, yt_p, vmem_working_set_bytes=64 * 1024))
    ref_p = jax.block_until_ready(_reference_loss(yp_p, yt_p))
    assert jnp.allclose(loss_p, ref_p, atol=1e-5, rtol=1e-4), (loss_p, ref_p)

    print("KERNEL_OK")
</pallas_src>

<mosaic_0001>
module attributes {stable_mosaic.version = 11 : i64} {
  func.func @_ms_loss_kernel(%arg0: i32, %arg1: memref<8x128xf32, #tpu.memory_space<vmem>>, %arg2: memref<8x128xf32, #tpu.memory_space<vmem>>, %arg3: memref<1x1x1xf32, #tpu.memory_space<vmem>>) attributes {dimension_semantics = [#tpu.dimension_semantics<parallel>], iteration_bounds = array<i64: 2>, scalar_prefetch = 0 : i64, scratch_operands = 0 : i64, tpu.core_type = #tpu.core_type<tc>, window_params = [{transform_indices = @transform_0, window_bounds = array<i64: 8, 128>}, {transform_indices = @transform_1, window_bounds = array<i64: 8, 128>}, {transform_indices = @transform_2, window_bounds = array<i64: 1, 1, 1>}]} {
    %c0 = arith.constant 0 : index
    %c0_0 = arith.constant 0 : index
    %0 = vector.load %arg1[%c0, %c0_0] : memref<8x128xf32, #tpu.memory_space<vmem>>, vector<8x128xf32>
    %c0_1 = arith.constant 0 : index
    %c0_2 = arith.constant 0 : index
    %1 = vector.load %arg2[%c0_1, %c0_2] : memref<8x128xf32, #tpu.memory_space<vmem>>, vector<8x128xf32>
    %2 = arith.subf %0, %1 : vector<8x128xf32>
    %3 = math.absf %2 : vector<8x128xf32>
    %4 = vector.shape_cast %3 : vector<8x128xf32> to vector<1x8x128xf32>
    %cst = arith.constant dense<0.000000e+00> : vector<1xf32>
    %5 = vector.multi_reduction <add>, %4, %cst [1, 2] : vector<1x8x128xf32> to vector<1xf32>
    %6 = vector.shape_cast %5 : vector<1xf32> to vector<1x1x1xf32>
    %7 = vector.extract %6[0, 0, 0] : f32 from vector<1x1x1xf32>
    %cst_3 = arith.constant 2.500000e-01 : f32
    %8 = arith.mulf %cst_3, %7 : f32
    %cst_4 = arith.constant 0.000000e+00 : f32
    %9 = arith.addf %cst_4, %8 : f32
    %10 = tpu.iota {dimensions = array<i32: 1>} : vector<1x128xi32>
    %c127_i32 = arith.constant 127 : i32
    %11 = tpu.dynamic_rotate %2 by %c127_i32 dim 1 : vector<8x128xf32>, i32 -> vector<8x128xf32>
    %12 = arith.addf %2, %11 : vector<8x128xf32>
    %c112_i32 = arith.constant 112 : i32
    %13 = tpu.dynamic_rotate %12 by %c112_i32 dim 1 : vector<8x128xf32>, i32 -> vector<8x128xf32>
    %14 = arith.addf %12, %13 : vector<8x128xf32>
    %c17_i32 = arith.constant 17 : i32
    %15 = vector.broadcast %c17_i32 : i32 to vector<1x128xi32>
    %16 = arith.andi %10, %15 : vector<1x128xi32>
    %c0_i32 = arith.constant 0 : i32
    %17 = vector.broadcast %c0_i32 : i32 to vector<1x128xi32>
    %18 = arith.cmpi eq, %16, %17 : vector<1x128xi32>
    %19 = math.absf %14 : vector<8x128xf32>
    %cst_5 = arith.constant 0.000000e+00 : f32
    %20 = vector.shape_cast %18 : vector<1x128xi1> to vector<1x128xi1>
    %21 = vector.broadcast %20 : vector<1x128xi1> to vector<8x128xi1>
    %22 = vector.broadcast %cst_5 : f32 to vector<8x128xf32>
    %23 = arith.select %21, %19, %22 : vector<8x128xi1>, vector<8x128xf32>
    %24 = vector.shape_cast %23 : vector<8x128xf32> to vector<1x8x128xf32>
    %cst_6 = arith.constant dense<0.000000e+00> : vector<1xf32>
    %25 = vector.multi_reduction <add>, %24, %cst_6 [1, 2] : vector<1x8x128xf32> to vector<1xf32>
    %26 = vector.shape_cast %25 : vector<1xf32> to vector<1x1x1xf32>
    %27 = vector.extract %26[0, 0, 0] : f32 from vector<1x1x1xf32>
    %cst_7 = arith.constant 2.500000e-01 : f32
    %28 = arith.mulf %cst_7, %27 : f32
    %29 = arith.addf %9, %28 : f32
    %c126_i32 = arith.constant 126 : i32
    %30 = tpu.dynamic_rotate %14 by %c126_i32 dim 1 : vector<8x128xf32>, i32 -> vector<8x128xf32>
    %31 = arith.addf %14, %30 : vector<8x128xf32>
    %c96_i32 = arith.constant 96 : i32
    %32 = tpu.dynamic_rotate %31 by %c96_i32 dim 1 : vector<8x128xf32>, i32 -> vector<8x128xf32>
    %33 = arith.addf %31, %32 : vector<8x128xf32>
    %c51_i32 = arith.constant 51 : i32
    %34 = vector.broadcast %c51_i32 : i32 to vector<1x128xi32>
    %35 = arith.andi %10, %34 : vector<1x128xi32>
    %c0_i32_8 = arith.constant 0 : i32
    %36 = vector.broadcast %c0_i32_8 : i32 to vector<1x128xi32>
    %37 = arith.cmpi eq, %35, %36 : vector<1x128xi32>
    %38 = math.absf %33 : vector<8x128xf32>
    %cst_9 = arith.constant 0.000000e+00 : f32
    %39 = vector.shape_cast %37 : vector<1x128xi1> to vector<1x128xi1>
    %40 = vector.broadcast %39 : vector<1x128xi1> to vector<8x128xi1>
    %41 = vector.broadcast %cst_9 : f32 to vector<8x128xf32>
    %42 = arith.select %40, %38, %41 : vector<8x128xi1>, vector<8x128xf32>
    %43 = vector.shape_cast %42 : vector<8x128xf32> to vector<1x8x128xf32>
    %cst_10 = arith.constant dense<0.000000e+00> : vector<1xf32>
    %44 = vector.multi_reduction <add>, %43, %cst_10 [1, 2] : vector<1x8x128xf32> to vector<1xf32>
    %45 = vector.shape_cast %44 : vector<1xf32> to vector<1x1x1xf32>
    %46 = vector.extract %45[0, 0, 0] : f32 from vector<1x1x1xf32>
    %cst_11 = arith.constant 2.500000e-01 : f32
    %47 = arith.mulf %cst_11, %46 : f32
    %48 = arith.addf %29, %47 : f32
    %c124_i32 = arith.constant 124 : i32
    %49 = tpu.dynamic_rotate %33 by %c124_i32 dim 1 : vector<8x128xf32>, i32 -> vector<8x128xf32>
    %50 = arith.addf %33, %49 : vector<8x128xf32>
    %c64_i32 = arith.constant 64 : i32
    %51 = tpu.dynamic_rotate %50 by %c64_i32 dim 1 : vector<8x128xf32>, i32 -> vector<8x128xf32>
    %52 = arith.addf %50, %51 : vector<8x128xf32>
    %c119_i32 = arith.constant 119 : i32
    %53 = vector.broadcast %c119_i32 : i32 to vector<1x128xi32>
    %54 = arith.andi %10, %53 : vector<1x128xi32>
    %c0_i32_12 = arith.constant 0 : i32
    %55 = vector.broadcast %c0_i32_12 : i32 to vector<1x128xi32>
    %56 = arith.cmpi eq, %54, %55 : vector<1x128xi32>
    %57 = math.absf %52 : vector<8x128xf32>
    %cst_13 = arith.constant 0.000000e+00 : f32
    %58 = vector.shape_cast %56 : vector<1x128xi1> to vector<1x128xi1>
    %59 = vector.broadcast %58 : vector<1x128xi1> to vector<8x128xi1>
    %60 = vector.broadcast %cst_13 : f32 to vector<8x128xf32>
    %61 = arith.select %59, %57, %60 : vector<8x128xi1>, vector<8x128xf32>
    %62 = vector.shape_cast %61 : vector<8x128xf32> to vector<1x8x128xf32>
    %cst_14 = arith.constant dense<0.000000e+00> : vector<1xf32>
    %63 = vector.multi_reduction <add>, %62, %cst_14 [1, 2] : vector<1x8x128xf32> to vector<1xf32>
    %64 = vector.shape_cast %63 : vector<1xf32> to vector<1x1x1xf32>
    %65 = vector.extract %64[0, 0, 0] : f32 from vector<1x1x1xf32>
    %cst_15 = arith.constant 2.500000e-01 : f32
    %66 = arith.mulf %cst_15, %65 : f32
    %67 = arith.addf %48, %66 : f32
    %68 = vector.broadcast %67 : f32 to vector<1x1x1xf32>
    %c0_16 = arith.constant 0 : index
    %c0_17 = arith.constant 0 : index
    %c0_18 = arith.constant 0 : index
    %69 = vector.load %arg3[%c0_16, %c0_17, %c0_18] : memref<1x1x1xf32, #tpu.memory_space<vmem>>, vector<1x1x1xf32>
    tpu.vector_store %arg3[%c0_16, %c0_17, %c0_18], %68 {strides = array<i32>} : memref<1x1x1xf32, #tpu.memory_space<vmem>>, vector<1x1x1xf32>,
    return
  }
  func.func @transform_0(%arg0: i32) -> (i32, i32) {
    %c0_i32 = arith.constant 0 : i32
    %c0_i32_0 = arith.constant 0 : i32
    return %arg0, %c0_i32 : i32, i32
  }
  func.func @transform_1(%arg0: i32) -> (i32, i32) {
    %c0_i32 = arith.constant 0 : i32
    %c0_i32_0 = arith.constant 0 : i32
    return %arg0, %c0_i32 : i32, i32
  }
  func.func @transform_2(%arg0: i32) -> (i32, i32, i32) {
    %c0_i32 = arith.constant 0 : i32
    %c0_i32_0 = arith.constant 0 : i32
    %c0_i32_1 = arith.constant 0 : i32
    return %arg0, %c0_i32, %c0_i32_0 : i32, i32, i32
  }
}

</mosaic_0001>

<llo_original>
// kernel: tpu_custom_call.1
$region0: #{tpu_custom_call.1}
  #allocation0 [shape = 'u32[]', space=smem, size = 0x4, offset = 0x4, fixed_abs, tag = 'smem constant byte address 0x4 - core index']
  #allocation1 [shape = 'u32[144,128]{1,0:T(1,128)}', space=vmem, size = 0x12000, scoped, tag = 'internal scratch']
  %s0 = inlined_call_operand.hbm [shape: f32[16,128], index: 0, kind: input, shape index: {}]
  %s1 = inlined_call_operand.hbm [shape: f32[16,128], index: 1, kind: input, shape index: {}]
  %s2 = inlined_call_operand.vmem [shape: f32[2,1,1], index: 2, kind: output, shape index: {}]
  %s3 = sld [smem:[#allocation0]]
  $region49: #{tpu_custom_call.1} parent=0
    _
  %s5 = ssub.s32 1, %s3
  %s6 = scalar_select 0, %s5, %s3
  $region1: #{tpu_custom_call.1} parent=0
    #allocation2 [shape = 'u8[8192]{0}', space=vmem, size = 0x2000, scoped, tag = 'input window, operand 0']
    #allocation3 [shape = 's32[2]{0}', space=sflag, size = 0x8, scoped, tag = 'scoped memory for tpu_custom_call.1']
    #allocation4 [shape = 'u8[8192]{0}', space=vmem, size = 0x2000, scoped, tag = 'input window, operand 1']
    #allocation5 [shape = 's32[2]{0}', space=sflag, size = 0x8, scoped, tag = 'scoped memory for tpu_custom_call.1']
    %7 = vsyncpa [#allocation3], 0
    %s8 = scalar_lea.sflag [#allocation3], 1
    %9 = vsyncpa %s8, 0
    %10 = vsyncpa [#allocation5], 0
    %s11 = scalar_lea.sflag [#allocation5], 1
    %12 = vsyncpa %s11, 0
    loop: start=0, step=1, limit=4
    $region2: #{tpu_custom_call.1} parent=1 // loop_pre_header
      _
    $region3: #{tpu_custom_call.1} parent=1 // loop_header
      %s14 = sphi 0, %s18
      %p15 = scmp.ge.s32.totalorder %s14, 4
      %s24 = sphi 0, %s26
      %s27 = sphi 0, %s24
      %s28 = sphi 0, %s27
      %s44 = sphi 0, %s28
      %s50 = sphi 0, %s52
      %s53 = sphi 0, %s50
      %s54 = sphi 0, %s53
      %s70 = sphi 0, %s54
      %s76 = sphi 0, %s78
      %s79 = sphi 0, %s76
      %s80 = sphi 0, %s79
      %s96 = sphi 0, %s80
    $region4: #{tpu_custom_call.1} parent=1 // loop_header_branch
      %17 = sbr.rel (%p15) target = $region8
    $region5: #{tpu_custom_call.1} parent=1 // loop_body
      %s19 = ssub.s32 %s14, 1
      %s20 = ssub.s32 %s14, 2
      %s21 = sadd.s32 %s14, 1
      %s22 = ssub.s32 %s14, %s21
      %p23 = scmp.eq.s32.totalorder %s22, 0
      %s25 = sadd.s32 %s24, 1
      %s26 = scalar_select %p23, %s24, %s25
      %p29 = pneg %p23
      %p30 = scmp.eq.s32.totalorder %s14, 1
      %p31 = por %p29, %p30
      %p32 = scmp.ne.s32.totalorder %s24, %s27
      %p33 = scmp.eq.s32.totalorder %s14, 0
      %p34 = por %p32, %p33
      %p35 = scmp.ne.s32.totalorder %s24, %s27
      %p36 = scmp.eq.s32.totalorder %s19, 1
      %p37 = por %p35, %p36
      %p38 = scmp.ne.s32.totalorder %s27, %s28
      %p39 = scmp.eq.s32.totalorder %s19, 0
      %p40 = por %p38, %p39
      %p41 = scmp.ne.s32.totalorder %s27, %s28
      %p42 = scmp.eq.s32.totalorder %s20, 1
      %p43 = por %p41, %p42
      %p45 = scmp.ne.s32.totalorder %s28, %s44
      %p46 = scmp.eq.s32.totalorder %s20, 0
      %p47 = por %p45, %p46
      %s48 = ssub.s32 %s14, %s21
      %p49 = scmp.eq.s32.totalorder %s48, 0
      %s51 = sadd.s32 %s50, 1
      %s52 = scalar_select %p49, %s50, %s51
      %p55 = pneg %p49
      %p56 = scmp.eq.s32.totalorder %s14, 1
      %p57 = por %p55, %p56
      %p58 = scmp.ne.s32.totalorder %s50, %s53
      %p59 = scmp.eq.s32.totalorder %s14, 0
      %p60 = por %p58, %p59
      %p61 = scmp.ne.s32.totalorder %s50, %s53
      %p62 = scmp.eq.s32.totalorder %s19, 1
      %p63 = por %p61, %p62
      %p64 = scmp.ne.s32.totalorder %s53, %s54
      %p65 = scmp.eq.s32.totalorder %s19, 0
      %p66 = por %p64, %p65
      %p67 = scmp.ne.s32.totalorder %s53, %s54
      %p68 = scmp.eq.s32.totalorder %s20, 1
      %p69 = por %p67, %p68
      %p71 = scmp.ne.s32.totalorder %s54, %s70
      %p72 = scmp.eq.s32.totalorder %s20, 0
      %p73 = por %p71, %p72
      %s74 = ssub.s32 %s14, %s21
      %p75 = scmp.eq.s32.totalorder %s74, 0
      %s77 = sadd.s32 %s76, 1
      %s78 = scalar_select %p75, %s76, %s77
      %p81 = pneg %p75
      %p82 = scmp.eq.s32.totalorder %s14, 1
      %p83 = por %p81, %p82
      %p84 = scmp.ne.s32.totalorder %s76, %s79
      %p85 = scmp.eq.s32.totalorder %s14, 0
      %p86 = por %p84, %p85
      %p87 = scmp.ne.s32.totalorder %s76, %s79
      %p88 = scmp.eq.s32.totalorder %s19, 1
      %p89 = por %p87, %p88
      %p90 = scmp.ne.s32.totalorder %s79, %s80
      %p91 = scmp.eq.s32.totalorder %s19, 0
      %p92 = por %p90, %p91
      %p93 = scmp.ne.s32.totalorder %s79, %s80
      %p94 = scmp.eq.s32.totalorder %s20, 1
      %p95 = por %p93, %p94
      %p97 = scmp.ne.s32.totalorder %s80, %s96
      %p98 = scmp.eq.s32.totalorder %s20, 0
      %p99 = por %p97, %p98
      %p100 = scmp.le.s32.totalorder 1, %s14
      %p101 = scmp.lt.s32.totalorder %s14, 3
      %p102 = pnand %p100, %p101
      %p103 = pneg %p102
      // Predicated region
      $region9: #{tpu_custom_call.1} parent=5 // pred_check
        _
      $region10: #{tpu_custom_call.1} parent=5 // pred_check_branch
        %105 = sbr.rel (%p102) target = $region12
      $region11: #{tpu_custom_call.1} parent=5 // pred_region
        %s106 = ssub.s32 %s14, 1
      $region12: #{tpu_custom_call.1} parent=5 // pred_fallthru
        _
      %p107 = scmp.lt.s32.totalorder %s14, 2
      // Predicated region
      $region13: #{tpu_custom_call.1} parent=5 // pred_check
        %p108 = pneg %p107
      $region14: #{tpu_custom_call.1} parent=5 // pred_check_branch
        %110 = sbr.rel (%p108) target = $region16
      $region15: #{tpu_custom_call.1} parent=5 // pred_region
        // Predicated region
        $region17: #{tpu_custom_call.1} parent=15 // pred_check
          %p111 = pneg %p34
        $region18: #{tpu_custom_call.1} parent=15 // pred_check_branch
          %113 = sbr.rel (%p111) target = $region20
        $region19: #{tpu_custom_call.1} parent=15 // pred_region
          %s114 = sand.u32 %s24, 1
          %s115 = scalar_lea.sflag [#allocation3], %s114
          %s116 = sand.u32 %s24, 1
          %s117 = smul.addr %s116, 8
          %s118 = scalar_lea.vmem [#allocation2], %s117
          %s120 = ssub.s32 128, 128
          %121 = vsyncadd %s115, %s120
          %s122 = smul.addr %s14, 128
          %s123 = scalar_lea.hbm %s0, %s122
          %s125 = sshll.u32 %s118, 4
          %s126 = int_to_ptr.vmem [resolvable:$true] %s125
          %128 = dma.hbm_to_vmem [thread:$0]  %s123, 128, %s126, %s115
        $region20: #{tpu_custom_call.1} parent=15 // pred_fallthru
          _
        // Predicated region
        $region21: #{tpu_custom_call.1} parent=15 // pred_check
          %p129 = pneg %p60
        $region22: #{tpu_custom_call.1} parent=15 // pred_check_branch
          %131 = sbr.rel (%p129) target = $region24
        $region23: #{tpu_custom_call.1} parent=15 // pred_region
          %s132 = sand.u32 %s50, 1
          %s133 = scalar_lea.sflag [#allocation5], %s132
          %s134 = sand.u32 %s50, 1
          %s135 = smul.addr %s134, 8
          %s136 = scalar_lea.vmem [#allocation4], %s135
          %s138 = ssub.s32 128, 128
          %139 = vsyncadd %s133, %s138
          %s140 = smul.addr %s14, 128
          %s141 = scalar_lea.hbm %s1, %s140
          %s143 = sshll.u32 %s136, 4
          %s144 = int_to_ptr.vmem [resolvable:$true] %s143
          %146 = dma.hbm_to_vmem [thread:$0]  %s141, 128, %s144, %s133
        $region24: #{tpu_custom_call.1} parent=15 // pred_fallthru
          _
      $region16: #{tpu_custom_call.1} parent=5 // pred_fallthru
        _
      %p147 = scmp.le.s32.totalorder 1, %s14
      %p148 = scmp.lt.s32.totalorder %s14, 3
      %p149 = pnand %p147, %p148
      %p150 = pneg %p149
      // Predicated region
      $region25: #{tpu_custom_call.1} parent=5 // pred_check
        _
      $region26: #{tpu_custom_call.1} parent=5 // pred_check_branch
        %152 = sbr.rel (%p149) target = $region28
      $region27: #{tpu_custom_call.1} parent=5 // pred_region
        %s153 = ssub.s32 %s14, 1
        %s154 = sand.u32 %s27, 1
        %s155 = scalar_lea.sflag [#allocation3], %s154
        %s156 = sand.u32 %s27, 1
        %s157 = smul.addr %s156, 8
        %s158 = scalar_lea.vmem [#allocation2], %s157
        // Predicated region
        $region29: #{tpu_custom_call.1} parent=27 // pred_check
          %p159 = pneg %p40
        $region30: #{tpu_custom_call.1} parent=27 // pred_check_branch
          %161 = sbr.rel (%p159) target = $region32
        $region31: #{tpu_custom_call.1} parent=27 // pred_region
          %162 = dma.done %s155, 128
        $region32: #{tpu_custom_call.1} parent=27 // pred_fallthru
          _
        %s163 = sand.u32 %s53, 1
        %s164 = scalar_lea.sflag [#allocation5], %s163
        %s165 = sand.u32 %s53, 1
        %s166 = smul.addr %s165, 8
        %s167 = scalar_lea.vmem [#allocation4], %s166
        // Predicated region
        $region33: #{tpu_custom_call.1} parent=27 // pred_check
          %p168 = pneg %p66
        $region34: #{tpu_custom_call.1} parent=27 // pred_check_branch
          %170 = sbr.rel (%p168) target = $region36
        $region35: #{tpu_custom_call.1} parent=27 // pred_region
          %171 = dma.done %s164, 128
        $region36: #{tpu_custom_call.1} parent=27 // pred_fallthru
          _
        %s172 = sand.u32 %s27, 1
        %s173 = scalar_lea.sflag [#allocation3], %s172
        %s174 = sand.u32 %s27, 1
        %s175 = smul.addr %s174, 8
        %s176 = scalar_lea.vmem [#allocation2], %s175
        %p177 = pneg %p40
        %p178 = pneg %p37
        %s179 = sand.u32 %s53, 1
        %s180 = scalar_lea.sflag [#allocation5], %s179
        %s181 = sand.u32 %s53, 1
        %s182 = smul.addr %s181, 8
        %s183 = scalar_lea.vmem [#allocation4], %s182
        %p184 = pneg %p66
        %p185 = pneg %p63
        %p186 = pneg %p92
        %p187 = pneg %p89
        %p188 = scmp.lt.s32.totalorder %s19, 1
        %s189 = scalar_select %p188, %s19, 1
        %s190 = scalar_lea.vmem %s2, %s189
        %p191 = scmp.lt.s32.totalorder %s19, 1
        %s192 = scalar_select %p191, %s19, 1
        %s193 = scalar_lea.vmem %s2, %s192
        %v194 = vld [vmem:[%s158] sm:$0xff]
        %v195 = vld [vmem:[%s167] sm:$0xff]
        %v196 = vsub.f32 %v194, %v195
        %v197 = vand.u32 2147483647, %v196
        %198 = vadd.xlane.f32.xlu0 %v197
        %v199 = vpop.xlane.xlu0 %198
        %v200 = vrot.slane %v199, 4
        %v201 = vadd.f32 %v199, %v200
        %v202 = vrot.slane %v201, 2
        %v203 = vadd.f32 %v201, %v202
        %v204 = vrot.slane %v203, 1
        %v205 = vadd.f32 %v203, %v204
        %s206 = vtos %v205
        %s207 = smul.f32 %s206, 0.25
        %s208 = sadd.f32 %s207, 0.0
        %v209 = vlaneseq
        %v210 = vand.u32 %v209, 127
        %211 = vrot.lane.b32.xlu0 %v196, 127
        %v212 = vpop.permute.xlu0 %211
        %v213 = vadd.f32 %v196, %v212
        %214 = vrot.lane.b32.xlu0 %v213, 112
        %v215 = vpop.permute.xlu0 %214
        %v216 = vadd.f32 %v213, %v215
        %v217 = vand.u32 %v210, 17
        %vm218 = vcmp.eq.s32.totalorder %v217, 0
        %v219 = vand.u32 2147483647, %v216
        %v220 = vsel %vm218, 1, 0
        %vm221 = vcmp.eq.s32.totalorder %v220, 1
        %v222 = vsel %vm221, %v219, 0.0
        %223 = vadd.xlane.f32.xlu0 %v222
        %v224 = vpop.xlane.xlu0 %223
        %v225 = vrot.slane %v224, 4
        %v226 = vadd.f32 %v224, %v225
        %v227 = vrot.slane %v226, 2
        %v228 = vadd.f32 %v226, %v227
        %v229 = vrot.slane %v228, 1
        %v230 = vadd.f32 %v228, %v229
        %s231 = vtos %v230
        %s232 = smul.f32 %s231, 0.25
        %s233 = sadd.f32 %s208, %s232
        %234 = vrot.lane.b32.xlu0 %v216, 126
        %v235 = vpop.permute.xlu0 %234
        %v236 = vadd.f32 %v216, %v235
        %237 = vrot.lane.b32.xlu0 %v236, 96
        %v238 = vpop.permute.xlu0 %237
        %v239 = vadd.f32 %v236, %v238
        %v240 = vand.u32 %v210, 51
        %vm241 = vcmp.eq.s32.totalorder %v240, 0
        %v242 = vand.u32 2147483647, %v239
        %v243 = vsel %vm241, 1, 0
        %vm244 = vcmp.eq.s32.totalorder %v243, 1
        %v245 = vsel %vm244, %v242, 0.0
        %246 = vadd.xlane.f32.xlu0 %v245
        %v247 = vpop.xlane.xlu0 %246
        %v248 = vrot.slane %v247, 4
        %v249 = vadd.f32 %v247, %v248
        %v250 = vrot.slane %v249, 2
        %v251 = vadd.f32 %v249, %v250
        %v252 = vrot.slane %v251, 1
        %v253 = vadd.f32 %v251, %v252
        %s254 = vtos %v253
        %s255 = smul.f32 %s254, 0.25
        %s256 = sadd.f32 %s233, %s255
        %257 = vrot.lane.b32.xlu0 %v239, 124
        %v258 = vpop.permute.xlu0 %257
        %v259 = vadd.f32 %v239, %v258
        %260 = vrot.lane.b32.xlu0 %v259, 64
        %v261 = vpop.permute.xlu0 %260
        %v262 = vadd.f32 %v259, %v261
        %v263 = vand.u32 %v210, 119
        %vm264 = vcmp.eq.s32.totalorder %v263, 0
        %v265 = vand.u32 2147483647, %v262
        %v266 = vsel %vm264, 1, 0
        %vm267 = vcmp.eq.s32.totalorder %v266, 1
        %v268 = vsel %vm267, %v265, 0.0
        %269 = vadd.xlane.f32.xlu0 %v268
        %v270 = vpop.xlane.xlu0 %269
        %v271 = vrot.slane %v270, 4
        %v272 = vadd.f32 %v270, %v271
        %v273 = vrot.slane %v272, 2
        %v274 = vadd.f32 %v272, %v273
        %v275 = vrot.slane %v274, 1
        %v276 = vadd.f32 %v274, %v275
        %s277 = vtos %v276
        %s278 = smul.f32 %s277, 0.25
        %s279 = sadd.f32 %s256, %s278
        %v280 = vstv %s279
        %vm281 = vcmask 0
        %282 = vst.msk [vmem:[%s193] sm:$0x1] %vm281, %v280
        %p283 = scmp.lt.s32.totalorder %s19, 1
        %s284 = scalar_select %p283, %s19, 1
        %s285 = scalar_lea.vmem %s2, %s284
        // Predicated region
        $region37: #{tpu_custom_call.1} parent=27 // pred_check
          %p286 = pneg %p89
        $region38: #{tpu_custom_call.1} parent=27 // pred_check_branch
          %288 = sbr.rel (%p286) target = $region40
        $region39: #{tpu_custom_call.1} parent=27 // pred_region
          _
        $region40: #{tpu_custom_call.1} parent=27 // pred_fallthru
          _
      $region28: #{tpu_custom_call.1} parent=5 // pred_fallthru
        _
      %p289 = scmp.le.s32.totalorder 2, %s14
      // Predicated region
      $region41: #{tpu_custom_call.1} parent=5 // pred_check
        %p290 = pneg %p289
      $region42: #{tpu_custom_call.1} parent=5 // pred_check_branch
        %292 = sbr.rel (%p290) target = $region44
      $region43: #{tpu_custom_call.1} parent=5 // pred_region
        %s293 = ssub.s32 %s14, 2
        // Predicated region
        $region45: #{tpu_custom_call.1} parent=43 // pred_check
          %p294 = pneg %p95
        $region46: #{tpu_custom_call.1} parent=43 // pred_check_branch
          %296 = sbr.rel (%p294) target = $region48
        $region47: #{tpu_custom_call.1} parent=43 // pred_region
          %p297 = scmp.lt.s32.totalorder %s20, 1
          %s298 = scalar_select %p297, %s20, 1
          %s299 = scalar_lea.vmem %s2, %s298
        $region48: #{tpu_custom_call.1} parent=43 // pred_fallthru
          _
      $region44: #{tpu_custom_call.1} parent=5 // pred_fallthru
        _
    $region6: #{tpu_custom_call.1} parent=1 // loop_footer
      %s18 = sadd.s32 1, %s14
    $region7: #{tpu_custom_call.1} parent=1 // loop_footer_branch
      %13 = sbr.rel target = $region3
    $region8: #{tpu_custom_call.1} parent=1 // loop_exit
      _
    %300 = vsyncpa [#allocation3], 1
    %s301 = scalar_lea.sflag [#allocation3], 1
    %302 = vsyncpa %s301, 1
    %303 = vsyncpa [#allocation5], 1
    %s304 = scalar_lea.sflag [#allocation5], 1
    %305 = vsyncpa %s304, 1

</llo_original>
